<compile_context>
chip_gen: v7x
topology: tpu7x:2x2x1
jax: 0.10.0
libtpu: 0.0.40
codegen_flags: <defaults>
</compile_context>

<pallas_src>
import functools

import jax
import jax.numpy as jnp
from jax.experimental import pallas as pl
from jax.experimental.pallas import tpu as pltpu


def _attention_head_kernel(labels_ref, x_ref, w_ref, bw_ref, v_ref, bv_ref,
                           out_ref, *, nseg, bt):
    # Per grid step (one block of `bt` documents):
    #   labels_ref: (1, bt, S) int32   sentence id per token
    #   x_ref:      (bt, S, D)         token embeddings (compute_dtype)
    #   w_ref: (D, Hd), bw_ref: (1, Hd), v_ref: (1, Hd), bv_ref: (1, 1)  [f32]
    #   out_ref:    (1, bt, D) f32     context vector per document
    lab = labels_ref[0]                                   # (bt, S) int32
    x = x_ref[...]                                        # (bt, S, D)
    S = lab.shape[1]
    D = x.shape[-1]
    R = bt * nseg                                         # stacked segment rows

    # ---- per-document segment one-hot: ONE compare per element --------------
    seg = jax.lax.broadcasted_iota(jnp.int32, (bt, nseg, S), 1) + 1   # ids 1..nseg
    hit = lab[:, None, :] == seg                          # (bt, nseg, S) bool
    counts = jnp.sum(hit.astype(jnp.float32), axis=2, keepdims=True)  # (bt, nseg, 1)

    # ---- per-document segment sums on the MXU; normalize AFTER the matmul ---
    # Batched einsum = bt independent (nseg, S) @ (S, D) matmuls — no
    # block-diagonal waste; the operand is an exact 0/1 matrix even in bf16.
    feats = jnp.einsum("bls,bsd->bld", hit.astype(x.dtype), x,
                       preferred_element_type=jnp.float32)            # (bt, nseg, D)
    feats = feats * (1.0 / jnp.maximum(counts, 1e-12))    # F.normalize(p=1), f32
    # nseg is padded to a multiple of 8 by the wrapper, so this collapse is a
    # layout-preserving sublane reinterpretation (no relayout copy).
    feats2 = feats.reshape(R, D)                          # (R, D)

    # ---- fused attention-score chain shared by all documents in the block ---
    att = jnp.tanh(jnp.dot(feats2, w_ref[...],
                           preferred_element_type=jnp.float32) + bw_ref[...])   # (R, Hd)
    # V projection with scores laid out along lanes: (1,Hd) x (R,Hd)^T -> (1,R).
    score = jax.lax.dot_general(v_ref[...], att, (((1,), (1,)), ((), ())),
                                preferred_element_type=jnp.float32) + bv_ref[...]

    # ---- per-document padding mask + masked softmax along lanes -------------
    maxlab = jnp.max(lab, axis=1, keepdims=True)          # (bt, 1) int32
    col = jax.lax.broadcasted_iota(jnp.int32, (bt, R), 1)
    lo = jax.lax.broadcasted_iota(jnp.int32, (bt, R), 0) * nseg
    # Column r holds (doc r//nseg, segment r%nseg + 1); for document d the valid
    # columns are exactly [d*nseg, d*nseg + maxlab[d]) — no division needed.
    valid = (col >= lo) & (col < lo + maxlab)             # (bt, R)

    score_w = jnp.where(valid, score, -10000.0)           # broadcast (1,R)->(bt,R)
    m = jnp.max(score_w, axis=1, keepdims=True)           # lane reduction
    # Fold the mask into the numerator; guard the denominator so a document with
    # no valid segments yields an all-zero row (reference: softmax * mask == 0).
    e = jnp.where(valid, jnp.exp(score_w - m), 0.0)
    denom = jnp.maximum(jnp.sum(e, axis=1, keepdims=True), 1e-30)
    attn = e / denom                                      # exact divide (parity)

    # ---- weighted segment sum as one lane-dense MXU matmul -------------------
    # (bt, R) @ (R, D): the bt-fold block-diagonal redundancy here is negligible
    # (bt/S of the feats matmul); HIGHEST precision only on this tiny dot.
    ctx = jnp.dot(attn, feats2, precision=jax.lax.Precision.HIGHEST,
                  preferred_element_type=jnp.float32)     # (bt, D)
    out_ref[0] = ctx.astype(out_ref.dtype)


def attention_head_forward(last_hidden_state, labeled_input_ids, w_w, w_b, v_w,
                           v_b, nseg, *, block_docs=None,
                           compute_dtype=jnp.bfloat16):
    """Pallas implementation of AttentionHead.forward.

    `compute_dtype` controls the streamed activation dtype (bf16 default for
    production: half the HBM traffic); all accumulation stays f32. Pass
    compute_dtype=jnp.float32 for bit-tight parity with an f32 reference.
    """
    B, S, D = last_hidden_state.shape
    Hd = w_w.shape[1]

    # Pad the per-document segment count to a multiple of 8 (sublane width).
    # Padded segments have empty one-hot rows and are masked out of the softmax,
    # so results are unchanged, but feats rows stay sublane-aligned.
    nseg_k = max(8, -(-int(nseg) // 8) * 8)

    if block_docs is None:
        # Keep >= 2 grid steps so both v7x TensorCores get work under the
        # "parallel" semantics; cap the block so the double-buffered x tile
        # stays well inside VMEM (v7x has only 64 MiB physical per core).
        limit = max(1, B // 2)
        x_doc_bytes = S * D * jnp.dtype(compute_dtype).itemsize
        limit = min(limit, max(1, (16 * 1024 * 1024) // max(1, x_doc_bytes)), 8)
        block_docs = max(d for d in range(1, limit + 1) if B % d == 0)
    assert B % block_docs == 0, "block_docs must divide the batch"
    G = B // block_docs

    # Host/XLA-side layout plumbing (free): block the document axis and keep the
    # last two dims of every BlockSpec equal to the full array dims.
    labels3 = labeled_input_ids.astype(jnp.int32).reshape(G, block_docs, S)
    x3 = last_hidden_state.astype(compute_dtype)            # (B, S, D)
    ww = w_w.astype(jnp.float32)
    bw = w_b.reshape(1, Hd).astype(jnp.float32)
    vrow = v_w.reshape(1, Hd).astype(jnp.float32)
    bv = v_b.reshape(1, 1).astype(jnp.float32)

    kernel = functools.partial(_attention_head_kernel, nseg=nseg_k, bt=block_docs)
    out = pl.pallas_call(
        kernel,
        out_shape=jax.ShapeDtypeStruct((G, block_docs, D), jnp.float32),
        grid=(G,),
        in_specs=[
            pl.BlockSpec((1, block_docs, S), lambda g: (g, 0, 0)),      # labels
            pl.BlockSpec((block_docs, S, D), lambda g: (g, 0, 0)),      # hidden states
            pl.BlockSpec((D, Hd), lambda g: (0, 0)),                    # W weight (VMEM-resident)
            pl.BlockSpec((1, Hd), lambda g: (0, 0)),                    # W bias
            pl.BlockSpec((1, Hd), lambda g: (0, 0)),                    # V weight as a row
            pl.BlockSpec((1, 1), lambda g: (0, 0)),                     # V bias
        ],
        out_specs=pl.BlockSpec((1, block_docs, D), lambda g: (g, 0, 0)),
        compiler_params=pltpu.CompilerParams(
            dimension_semantics=("parallel",),
            # Raise the scoped VMEM limit (v5e default 16 MiB, v6e 32 MiB) so
            # bigger doc blocks can stream; 64 MiB also equals v7x's physical.
            vmem_limit_bytes=64 * 1024 * 1024),
    )(labels3, x3, ww, bw, vrow, bv)
    return out.reshape(B, D)


def attention_head_reference(x, labels, w_w, w_b, v_w, v_b, nseg):
    """Pure-JAX reference mirroring the PyTorch forward."""
    seg = jnp.arange(1, nseg + 1)
    onehot = (labels[:, None, :] == seg[None, :, None]).astype(jnp.float32)  # (B, NSEG, S)
    counts = onehot.sum(-1, keepdims=True)
    m = onehot / jnp.maximum(counts, 1e-12)
    feats = jnp.einsum("bls,bsd->bld", m, x)
    maxlab = labels.max(axis=1)
    mask = (seg[None, :] <= maxlab[:, None]).astype(jnp.float32)             # (B, NSEG)
    att = jnp.tanh(feats @ w_w + w_b)
    score = att @ v_w + v_b
    score = jnp.where(mask[..., None] == 0.0, -10000.0, score)
    w = jax.nn.softmax(score, axis=1)
    return jnp.sum(w * mask[..., None] * feats, axis=1)


if __name__ == "__main__":
    B, S = 2, 16
    in_features, hidden_dim = 32, 16

    key = jax.random.PRNGKey(0)
    kx, kw, kbw, kv, kbv = jax.random.split(key, 5)

    last_hidden_state = jax.random.normal(kx, (B, S, in_features), dtype=jnp.float32)
    # Deterministic sentence labels; segment 0 is dropped (as in the module).
    labeled_input_ids = jnp.array(
        [[0, 0, 1, 1, 1, 2, 2, 2, 3, 3, 3, 3, 4, 4, 4, 4],
         [0, 1, 1, 1, 2, 2, 2, 2, 3, 3, 3, 3, 3, 0, 0, 0]], dtype=jnp.int32)

    # NSEG known at trace time (replaces the data-dependent nested-tensor packing).
    nseg = int(labeled_input_ids.max())          # segment 0 dropped -> 4 rows

    # Deterministic Linear init (PyTorch-style uniform +-1/sqrt(fan_in)).
    bnd_w = 1.0 / jnp.sqrt(in_features)
    bnd_v = 1.0 / jnp.sqrt(hidden_dim)
    w_w = jax.random.uniform(kw, (in_features, hidden_dim), jnp.float32, -bnd_w, bnd_w)
    w_b = jax.random.uniform(kbw, (hidden_dim,), jnp.float32, -bnd_w, bnd_w)
    v_w = jax.random.uniform(kv, (hidden_dim, 1), jnp.float32, -bnd_v, bnd_v)
    v_b = jax.random.uniform(kbv, (1,), jnp.float32, -bnd_v, bnd_v)

    ref = attention_head_reference(last_hidden_state, labeled_input_ids,
                                   w_w, w_b, v_w, v_b, nseg)

    # 1) f32 activations, default block_docs (=1 -> grid of 2 parallel steps):
    #    exact parity with the pure-JAX reference.
    out_f32 = attention_head_forward(last_hidden_state, labeled_input_ids,
                                     w_w, w_b, v_w, v_b, nseg,
                                     compute_dtype=jnp.float32)
    out_f32 = jax.block_until_ready(out_f32)
    assert out_f32.shape == (B, in_features)
    assert jnp.allclose(out_f32, ref, atol=1e-5, rtol=1e-5), (out_f32, ref)

    # 2) Multi-document block (exercises the batched per-doc feats einsum, bt=2).
    out_bd2 = attention_head_forward(last_hidden_state, labeled_input_ids,
                                     w_w, w_b, v_w, v_b, nseg,
                                     block_docs=2, compute_dtype=jnp.float32)
    out_bd2 = jax.block_until_ready(out_bd2)
    assert jnp.allclose(out_bd2, ref, atol=1e-5, rtol=1e-5), (out_bd2, ref)

    # 3) Production default: bf16 activation streaming, f32 accumulation.
    out_bf16 = attention_head_forward(last_hidden_state, labeled_input_ids,
                                      w_w, w_b, v_w, v_b, nseg)
    out_bf16 = jax.block_until_ready(out_bf16)
    assert jnp.allclose(out_bf16, ref, atol=2e-2, rtol=2e-2), (out_bf16, ref)

    print("KERNEL_OK")
</pallas_src>

<mosaic_0001>
module attributes {stable_mosaic.version = 11 : i64} {
  func.func @_attention_head_kernel(%arg0: i32, %arg1: memref<1x1x16xi32, #tpu.memory_space<vmem>>, %arg2: memref<1x16x32xf32, #tpu.memory_space<vmem>>, %arg3: memref<32x16xf32, #tpu.memory_space<vmem>>, %arg4: memref<1x16xf32, #tpu.memory_space<vmem>>, %arg5: memref<1x16xf32, #tpu.memory_space<vmem>>, %arg6: memref<1x1xf32, #tpu.memory_space<vmem>>, %arg7: memref<1x1x32xf32, #tpu.memory_space<vmem>>) attributes {dimension_semantics = [#tpu.dimension_semantics<parallel>], iteration_bounds = array<i64: 2>, scalar_prefetch = 0 : i64, scratch_operands = 0 : i64, tpu.core_type = #tpu.core_type<tc>, window_params = [{transform_indices = @transform_0, window_bounds = array<i64: 1, 1, 16>}, {transform_indices = @transform_1, window_bounds = array<i64: 1, 16, 32>}, {pipeline_mode = #tpu.pipeline_mode<synchronous>, transform_indices = @transform_2, window_bounds = array<i64: 32, 16>}, {pipeline_mode = #tpu.pipeline_mode<synchronous>, transform_indices = @transform_3, window_bounds = array<i64: 1, 16>}, {pipeline_mode = #tpu.pipeline_mode<synchronous>, transform_indices = @transform_4, window_bounds = array<i64: 1, 16>}, {pipeline_mode = #tpu.pipeline_mode<synchronous>, transform_indices = @transform_5, window_bounds = array<i64: 1, 1>}, {transform_indices = @transform_6, window_bounds = array<i64: 1, 1, 32>}]} {
    %c0 = arith.constant 0 : index
    %c0_0 = arith.constant 0 : index
    %c0_1 = arith.constant 0 : index
    %0 = vector.load %arg1[%c0, %c0_0, %c0_1] : memref<1x1x16xi32, #tpu.memory_space<vmem>>, vector<1x1x16xi32>
    %1 = vector.shape_cast %0 : vector<1x1x16xi32> to vector<1x16xi32>
    %c0_2 = arith.constant 0 : index
    %c0_3 = arith.constant 0 : index
    %c0_4 = arith.constant 0 : index
    %2 = vector.load %arg2[%c0_2, %c0_3, %c0_4] : memref<1x16x32xf32, #tpu.memory_space<vmem>>, vector<1x16x32xf32>
    %3 = tpu.iota {dimensions = array<i32: 1>} : vector<1x8x16xi32>
    %c1_i32 = arith.constant 1 : i32
    %4 = vector.broadcast %c1_i32 : i32 to vector<1x8x16xi32>
    %5 = arith.addi %3, %4 : vector<1x8x16xi32>
    %6 = vector.shape_cast %1 : vector<1x16xi32> to vector<1x1x16xi32>
    %7 = vector.broadcast %6 : vector<1x1x16xi32> to vector<1x8x16xi32>
    %8 = arith.cmpi eq, %7, %5 : vector<1x8x16xi32>
    %9 = arith.extui %8 : vector<1x8x16xi1> to vector<1x8x16xi32>
    %10 = arith.sitofp %9 : vector<1x8x16xi32> to vector<1x8x16xf32>
    %cst = arith.constant dense<0.000000e+00> : vector<1x8xf32>
    %11 = vector.multi_reduction <add>, %10, %cst [2] : vector<1x8x16xf32> to vector<1x8xf32>
    %12 = vector.shape_cast %11 : vector<1x8xf32> to vector<1x8x1xf32>
    %13 = arith.extui %8 : vector<1x8x16xi1> to vector<1x8x16xi32>
    %14 = arith.sitofp %13 : vector<1x8x16xi32> to vector<1x8x16xf32>
    "tpu.trace_start"() <{level = 10 : i32, message = "bls,bsd->bld"}> : () -> ()
    %cst_5 = arith.constant dense<0.000000e+00> : vector<1x8x32xf32>
    %15 = tpu.matmul %14, %2, %cst_5 {dimension_numbers = #tpu.dot_dimension_numbers<[2], [1], [1], [2], [0, 0, 0, 1, 1, 2], [0], [0]>} : vector<1x8x16xf32>, vector<1x16x32xf32>, vector<1x8x32xf32> -> vector<1x8x32xf32>
    "tpu.trace_stop"() : () -> ()
    %cst_6 = arith.constant 9.99999996E-13 : f32
    %16 = vector.broadcast %cst_6 : f32 to vector<1x8x1xf32>
    %17 = arith.maximumf %12, %16 : vector<1x8x1xf32>
    %cst_7 = arith.constant 1.000000e+00 : f32
    %18 = vector.broadcast %cst_7 : f32 to vector<1x8x1xf32>
    %19 = arith.divf %18, %17 : vector<1x8x1xf32>
    %20 = vector.broadcast %19 : vector<1x8x1xf32> to vector<1x8x32xf32>
    %21 = arith.mulf %15, %20 : vector<1x8x32xf32>
    %22 = vector.shape_cast %21 : vector<1x8x32xf32> to vector<8x32xf32>
    %c0_8 = arith.constant 0 : index
    %c0_9 = arith.constant 0 : index
    %23 = vector.load %arg3[%c0_8, %c0_9] : memref<32x16xf32, #tpu.memory_space<vmem>>, vector<32x16xf32>
    %cst_10 = arith.constant dense<0.000000e+00> : vector<8x16xf32>
    %24 = tpu.matmul %22, %23, %cst_10 {dimension_numbers = #tpu.dot_dimension_numbers<[1], [0], [0], [1], [0, 0, 1, 1], [], []>} : vector<8x32xf32>, vector<32x16xf32>, vector<8x16xf32> -> vector<8x16xf32>
    %c0_11 = arith.constant 0 : index
    %c0_12 = arith.constant 0 : index
    %25 = vector.load %arg4[%c0_11, %c0_12] : memref<1x16xf32, #tpu.memory_space<vmem>>, vector<1x16xf32>
    %26 = vector.broadcast %25 : vector<1x16xf32> to vector<8x16xf32>
    %27 = arith.addf %24, %26 : vector<8x16xf32>
    %28 = math.tanh %27 : vector<8x16xf32>
    %c0_13 = arith.constant 0 : index
    %c0_14 = arith.constant 0 : index
    %29 = vector.load %arg5[%c0_13, %c0_14] : memref<1x16xf32, #tpu.memory_space<vmem>>, vector<1x16xf32>
    %cst_15 = arith.constant dense<0.000000e+00> : vector<1x8xf32>
    %30 = tpu.matmul %29, %28, %cst_15 {dimension_numbers = #tpu.dot_dimension_numbers<[1], [1], [0], [0], [0, 0, 1, 0], [], []>} : vector<1x16xf32>, vector<8x16xf32>, vector<1x8xf32> -> vector<1x8xf32>
    %c0_16 = arith.constant 0 : index
    %c0_17 = arith.constant 0 : index
    %31 = vector.load %arg6[%c0_16, %c0_17] : memref<1x1xf32, #tpu.memory_space<vmem>>, vector<1x1xf32>
    %32 = vector.broadcast %31 : vector<1x1xf32> to vector<1x8xf32>
    %33 = arith.addf %30, %32 : vector<1x8xf32>
    %cst_18 = arith.constant dense<-2147483648> : vector<1xi32>
    %34 = vector.multi_reduction <maxsi>, %1, %cst_18 [1] : vector<1x16xi32> to vector<1xi32>
    %35 = vector.shape_cast %34 : vector<1xi32> to vector<1x1xi32>
    %36 = tpu.iota {dimensions = array<i32: 1>} : vector<1x8xi32>
    %37 = tpu.iota {dimensions = array<i32: 0>} : vector<1x8xi32>
    %c8_i32 = arith.constant 8 : i32
    %38 = vector.broadcast %c8_i32 : i32 to vector<1x8xi32>
    %39 = arith.muli %37, %38 : vector<1x8xi32>
    %40 = arith.cmpi sge, %36, %39 : vector<1x8xi32>
    %41 = vector.broadcast %35 : vector<1x1xi32> to vector<1x8xi32>
    %42 = arith.addi %39, %41 : vector<1x8xi32>
    %43 = arith.cmpi slt, %36, %42 : vector<1x8xi32>
    %44 = arith.andi %40, %43 : vector<1x8xi1>
    %cst_19 = arith.constant -1.000000e+04 : f32
    %45 = vector.broadcast %cst_19 : f32 to vector<1x8xf32>
    %46 = arith.select %44, %33, %45 : vector<1x8xi1>, vector<1x8xf32>
    %cst_20 = arith.constant dense<0xFF800000> : vector<1xf32>
    %47 = vector.multi_reduction <maximumf>, %46, %cst_20 [1] : vector<1x8xf32> to vector<1xf32>
    %48 = vector.shape_cast %47 : vector<1xf32> to vector<1x1xf32>
    %49 = vector.broadcast %48 : vector<1x1xf32> to vector<1x8xf32>
    %50 = arith.subf %46, %49 : vector<1x8xf32>
    %51 = math.exp %50 : vector<1x8xf32>
    %cst_21 = arith.constant 0.000000e+00 : f32
    %52 = vector.broadcast %cst_21 : f32 to vector<1x8xf32>
    %53 = arith.select %44, %51, %52 : vector<1x8xi1>, vector<1x8xf32>
    %cst_22 = arith.constant dense<0.000000e+00> : vector<1xf32>
    %54 = vector.multi_reduction <add>, %53, %cst_22 [1] : vector<1x8xf32> to vector<1xf32>
    %55 = vector.shape_cast %54 : vector<1xf32> to vector<1x1xf32>
    %cst_23 = arith.constant 1.000000e-30 : f32
    %56 = vector.broadcast %cst_23 : f32 to vector<1x1xf32>
    %57 = arith.maximumf %55, %56 : vector<1x1xf32>
    %58 = vector.broadcast %57 : vector<1x1xf32> to vector<1x8xf32>
    %59 = arith.divf %53, %58 : vector<1x8xf32>
    %cst_24 = arith.constant dense<0.000000e+00> : vector<1x32xf32>
    %60 = tpu.matmul %59, %22, %cst_24 {dimension_numbers = #tpu.dot_dimension_numbers<[1], [0], [0], [1], [0, 0, 1, 1], [], []>, precision = #tpu.contract_precision<fp32>} : vector<1x8xf32>, vector<8x32xf32>, vector<1x32xf32> -> vector<1x32xf32>
    %c0_25 = arith.constant 0 : index
    %c0_26 = arith.constant 0 : index
    %c0_27 = arith.constant 0 : index
    %61 = vector.load %arg7[%c0_25, %c0_26, %c0_27] : memref<1x1x32xf32, #tpu.memory_space<vmem>>, vector<1x1x32xf32>
    %62 = vector.shape_cast %61 : vector<1x1x32xf32> to vector<1x32xf32>
    %63 = vector.shape_cast %60 : vector<1x32xf32> to vector<1x1x32xf32>
    tpu.vector_store %arg7[%c0_25, %c0_26, %c0_27], %63 {strides = array<i32>} : memref<1x1x32xf32, #tpu.memory_space<vmem>>, vector<1x1x32xf32>,
    return
  }
  func.func @transform_0(%arg0: i32) -> (i32, i32, i32) {
    %c0_i32 = arith.constant 0 : i32
    %c0_i32_0 = arith.constant 0 : i32
    %c0_i32_1 = arith.constant 0 : i32
    return %arg0, %c0_i32, %c0_i32_0 : i32, i32, i32
  }
  func.func @transform_1(%arg0: i32) -> (i32, i32, i32) {
    %c0_i32 = arith.constant 0 : i32
    %c0_i32_0 = arith.constant 0 : i32
    %c0_i32_1 = arith.constant 0 : i32
    return %arg0, %c0_i32, %c0_i32_0 : i32, i32, i32
  }
  func.func @transform_2(%arg0: i32) -> (i32, i32) {
    %c0_i32 = arith.constant 0 : i32
    %c0_i32_0 = arith.constant 0 : i32
    %c0_i32_1 = arith.constant 0 : i32
    return %c0_i32, %c0_i32_0 : i32, i32
  }
  func.func @transform_3(%arg0: i32) -> (i32, i32) {
    %c0_i32 = arith.constant 0 : i32
    %c0_i32_0 = arith.constant 0 : i32
    %c0_i32_1 = arith.constant 0 : i32
    return %c0_i32, %c0_i32_0 : i32, i32
  }
  func.func @transform_4(%arg0: i32) -> (i32, i32) {
    %c0_i32 = arith.constant 0 : i32
    %c0_i32_0 = arith.constant 0 : i32
    %c0_i32_1 = arith.constant 0 : i32
    return %c0_i32, %c0_i32_0 : i32, i32
  }
  func.func @transform_5(%arg0: i32) -> (i32, i32) {
    %c0_i32 = arith.constant 0 : i32
    %c0_i32_0 = arith.constant 0 : i32
    %c0_i32_1 = arith.constant 0 : i32
    return %c0_i32, %c0_i32_0 : i32, i32
  }
  func.func @transform_6(%arg0: i32) -> (i32, i32, i32) {
    %c0_i32 = arith.constant 0 : i32
    %c0_i32_0 = arith.constant 0 : i32
    %c0_i32_1 = arith.constant 0 : i32
    return %arg0, %c0_i32, %c0_i32_0 : i32, i32, i32
  }
}

</mosaic_0001>

<llo_original>
// kernel: tpu_custom_call.1
$region0: #{tpu_custom_call.1}
  #allocation0 [shape = 'u32[]', space=smem, size = 0x4, offset = 0x4, fixed_abs, tag = 'smem constant byte address 0x4 - core index']
  #allocation1 [shape = 'u32[144,128]{1,0:T(1,128)}', space=vmem, size = 0x12000, scoped, tag = 'internal scratch']
  #allocation2 [shape = 'f32[1,1]{1,0:T(1,128)S(1)}', space=vmem, size = 0x200, scoped, tag = 'scoped memory for tpu_custom_call.1']
  %s0 = inlined_call_operand.hbm [shape: s32[2,1,16], index: 0, kind: input, shape index: {}]
  %s1 = inlined_call_operand.hbm [shape: f32[2,16,32], index: 1, kind: input, shape index: {}]
  %s2 = inlined_call_operand.hbm [shape: f32[32,16], index: 2, kind: input, shape index: {}]
  %s3 = inlined_call_operand.hbm [shape: f32[1,16], index: 3, kind: input, shape index: {}]
  %s4 = inlined_call_operand.hbm [shape: f32[1,16], index: 4, kind: input, shape index: {}]
  %s5 = inlined_call_operand.<no memory space> [shape: f32[1,1], index: 5, kind: input, shape index: {}]
  %s6 = inlined_call_operand.hbm [shape: f32[2,1,32], index: 6, kind: output, shape index: {}]
  %s7 = sld [smem:[#allocation0]]
  $region77: #{tpu_custom_call.1} parent=0
    _
  %s9 = ssub.s32 1, %s7
  %s10 = scalar_select 0, %s9, %s7
  %v11 = vstv %s5
  %12 = vst [vmem:[#allocation2] sm:$0x1] %v11
  $region1: #{tpu_custom_call.1} parent=0
    #allocation3 [shape = 'u8[1024]{0}', space=vmem, size = 0x400, scoped, tag = 'input window, operand 0']
    #allocation4 [shape = 's32[2]{0}', space=sflag, size = 0x8, scoped, tag = 'scoped memory for tpu_custom_call.1']
    #allocation5 [shape = 's32[2]{0}', space=sflag, size = 0x8, scoped, tag = 'scoped memory for tpu_custom_call.1']
    #allocation6 [shape = 'u8[16384]{0}', space=vmem, size = 0x4000, scoped, tag = 'input window, operand 1']
    #allocation7 [shape = 's32[2]{0}', space=sflag, size = 0x8, scoped, tag = 'scoped memory for tpu_custom_call.1']
    #allocation8 [shape = 'u8[16384]{0}', space=vmem, size = 0x4000, scoped, tag = 'input window, operand 2, single buffered']
    #allocation9 [shape = 'u8[512]{0}', space=vmem, size = 0x400, scoped, tag = 'input window, operand 3, single buffered']
    #allocation10 [shape = 's32[1]{0}', space=sflag, size = 0x4, scoped, tag = 'scoped memory for tpu_custom_call.1']
    #allocation11 [shape = 'u8[512]{0}', space=vmem, size = 0x400, scoped, tag = 'input window, operand 4, single buffered']
    #allocation12 [shape = 'u8[1024]{0}', space=vmem, size = 0x400, scoped, tag = 'output window, operand 0']
    %13 = vsyncpa [#allocation4], 0
    %s14 = scalar_lea.sflag [#allocation4], 1
    %15 = vsyncpa %s14, 0
    %16 = vsyncpa [#allocation7], 0
    %s17 = scalar_lea.sflag [#allocation7], 1
    %18 = vsyncpa %s17, 0
    %19 = vsyncpa [#allocation10], 0
    %20 = vsyncpa [#allocation5], 0
    %s21 = scalar_lea.sflag [#allocation5], 1
    %22 = vsyncpa %s21, 0
    loop: start=0, step=1, limit=4
    $region2: #{tpu_custom_call.1} parent=1 // loop_pre_header
      _
    $region3: #{tpu_custom_call.1} parent=1 // loop_header
      %s24 = sphi 0, %s28
      %p25 = scmp.ge.s32.totalorder %s24, 4
      %s34 = sphi 0, %s36
      %s37 = sphi 0, %s34
      %s38 = sphi 0, %s37
      %s54 = sphi 0, %s38
      %s60 = sphi 0, %s62
      %s63 = sphi 0, %s60
      %s64 = sphi 0, %s63
      %s80 = sphi 0, %s64
      %s84 = sphi 0, %s84
      %s86 = sphi 0, %s84
      %s87 = sphi 0, %s86
      %s101 = sphi 0, %s87
      %s105 = sphi 0, %s105
      %s107 = sphi 0, %s105
      %s108 = sphi 0, %s107
      %s122 = sphi 0, %s108
      %s126 = sphi 0, %s126
      %s128 = sphi 0, %s126
      %s129 = sphi 0, %s128
      %s143 = sphi 0, %s129
      %s147 = sphi 0, %s147
      %s149 = sphi 0, %s147
      %s150 = sphi 0, %s149
      %s164 = sphi 0, %s150
      %s170 = sphi 0, %s172
      %s173 = sphi 0, %s170
      %s174 = sphi 0, %s173
      %s190 = sphi 0, %s174
    $region4: #{tpu_custom_call.1} parent=1 // loop_header_branch
      %27 = sbr.rel (%p25) target = $region8
    $region5: #{tpu_custom_call.1} parent=1 // loop_body
      %s29 = ssub.s32 %s24, 1
      %s30 = ssub.s32 %s24, 2
      %s31 = sadd.s32 %s24, 1
      %s32 = ssub.s32 %s24, %s31
      %p33 = scmp.eq.s32.totalorder %s32, 0
      %s35 = sadd.s32 %s34, 1
      %s36 = scalar_select %p33, %s34, %s35
      %p39 = pneg %p33
      %p40 = scmp.eq.s32.totalorder %s24, 1
      %p41 = por %p39, %p40
      %p42 = scmp.ne.s32.totalorder %s34, %s37
      %p43 = scmp.eq.s32.totalorder %s24, 0
      %p44 = por %p42, %p43
      %p45 = scmp.ne.s32.totalorder %s34, %s37
      %p46 = scmp.eq.s32.totalorder %s29, 1
      %p47 = por %p45, %p46
      %p48 = scmp.ne.s32.totalorder %s37, %s38
      %p49 = scmp.eq.s32.totalorder %s29, 0
      %p50 = por %p48, %p49
      %p51 = scmp.ne.s32.totalorder %s37, %s38
      %p52 = scmp.eq.s32.totalorder %s30, 1
      %p53 = por %p51, %p52
      %p55 = scmp.ne.s32.totalorder %s38, %s54
      %p56 = scmp.eq.s32.totalorder %s30, 0
      %p57 = por %p55, %p56
      %s58 = ssub.s32 %s24, %s31
      %p59 = scmp.eq.s32.totalorder %s58, 0
      %s61 = sadd.s32 %s60, 1
      %s62 = scalar_select %p59, %s60, %s61
      %p65 = pneg %p59
      %p66 = scmp.eq.s32.totalorder %s24, 1
      %p67 = por %p65, %p66
      %p68 = scmp.ne.s32.totalorder %s60, %s63
      %p69 = scmp.eq.s32.totalorder %s24, 0
      %p70 = por %p68, %p69
      %p71 = scmp.ne.s32.totalorder %s60, %s63
      %p72 = scmp.eq.s32.totalorder %s29, 1
      %p73 = por %p71, %p72
      %p74 = scmp.ne.s32.totalorder %s63, %s64
      %p75 = scmp.eq.s32.totalorder %s29, 0
      %p76 = por %p74, %p75
      %p77 = scmp.ne.s32.totalorder %s63, %s64
      %p78 = scmp.eq.s32.totalorder %s30, 1
      %p79 = por %p77, %p78
      %p81 = scmp.ne.s32.totalorder %s64, %s80
      %p82 = scmp.eq.s32.totalorder %s30, 0
      %p83 = por %p81, %p82
      %s85 = sadd.s32 %s84, 1
      %p88 = scmp.eq.s32.totalorder %s24, 1
      %p89 = scmp.ne.s32.totalorder %s84, %s86
      %p90 = scmp.eq.s32.totalorder %s24, 0
      %p91 = por %p89, %p90
      %p92 = scmp.ne.s32.totalorder %s84, %s86
      %p93 = scmp.eq.s32.totalorder %s29, 1
      %p94 = por %p92, %p93
      %p95 = scmp.ne.s32.totalorder %s86, %s87
      %p96 = scmp.eq.s32.totalorder %s29, 0
      %p97 = por %p95, %p96
      %p98 = scmp.ne.s32.totalorder %s86, %s87
      %p99 = scmp.eq.s32.totalorder %s30, 1
      %p100 = por %p98, %p99
      %p102 = scmp.ne.s32.totalorder %s87, %s101
      %p103 = scmp.eq.s32.totalorder %s30, 0
      %p104 = por %p102, %p103
      %s106 = sadd.s32 %s105, 1
      %p109 = scmp.eq.s32.totalorder %s24, 1
      %p110 = scmp.ne.s32.totalorder %s105, %s107
      %p111 = scmp.eq.s32.totalorder %s24, 0
      %p112 = por %p110, %p111
      %p113 = scmp.ne.s32.totalorder %s105, %s107
      %p114 = scmp.eq.s32.totalorder %s29, 1
      %p115 = por %p113, %p114
      %p116 = scmp.ne.s32.totalorder %s107, %s108
      %p117 = scmp.eq.s32.totalorder %s29, 0
      %p118 = por %p116, %p117
      %p119 = scmp.ne.s32.totalorder %s107, %s108
      %p120 = scmp.eq.s32.totalorder %s30, 1
      %p121 = por %p119, %p120
      %p123 = scmp.ne.s32.totalorder %s108, %s122
      %p124 = scmp.eq.s32.totalorder %s30, 0
      %p125 = por %p123, %p124
      %s127 = sadd.s32 %s126, 1
      %p130 = scmp.eq.s32.totalorder %s24, 1
      %p131 = scmp.ne.s32.totalorder %s126, %s128
      %p132 = scmp.eq.s32.totalorder %s24, 0
      %p133 = por %p131, %p132
      %p134 = scmp.ne.s32.totalorder %s126, %s128
      %p135 = scmp.eq.s32.totalorder %s29, 1
      %p136 = por %p134, %p135
      %p137 = scmp.ne.s32.totalorder %s128, %s129
      %p138 = scmp.eq.s32.totalorder %s29, 0
      %p139 = por %p137, %p138
      %p140 = scmp.ne.s32.totalorder %s128, %s129
      %p141 = scmp.eq.s32.totalorder %s30, 1
      %p142 = por %p140, %p141
      %p144 = scmp.ne.s32.totalorder %s129, %s143
      %p145 = scmp.eq.s32.totalorder %s30, 0
      %p146 = por %p144, %p145
      %s148 = sadd.s32 %s147, 1
      %p151 = scmp.eq.s32.totalorder %s24, 1
      %p152 = scmp.ne.s32.totalorder %s147, %s149
      %p153 = scmp.eq.s32.totalorder %s24, 0
      %p154 = por %p152, %p153
      %p155 = scmp.ne.s32.totalorder %s147, %s149
      %p156 = scmp.eq.s32.totalorder %s29, 1
      %p157 = por %p155, %p156
      %p158 = scmp.ne.s32.totalorder %s149, %s150
      %p159 = scmp.eq.s32.totalorder %s29, 0
      %p160 = por %p158, %p159
      %p161 = scmp.ne.s32.totalorder %s149, %s150
      %p162 = scmp.eq.s32.totalorder %s30, 1
      %p163 = por %p161, %p162
      %p165 = scmp.ne.s32.totalorder %s150, %s164
      %p166 = scmp.eq.s32.totalorder %s30, 0
      %p167 = por %p165, %p166
      %s168 = ssub.s32 %s24, %s31
      %p169 = scmp.eq.s32.totalorder %s168, 0
      %s171 = sadd.s32 %s170, 1
      %s172 = scalar_select %p169, %s170, %s171
      %p175 = pneg %p169
      %p176 = scmp.eq.s32.totalorder %s24, 1
      %p177 = por %p175, %p176
      %p178 = scmp.ne.s32.totalorder %s170, %s173
      %p179 = scmp.eq.s32.totalorder %s24, 0
      %p180 = por %p178, %p179
      %p181 = scmp.ne.s32.totalorder %s170, %s173
      %p182 = scmp.eq.s32.totalorder %s29, 1
      %p183 = por %p181, %p182
      %p184 = scmp.ne.s32.totalorder %s173, %s174
      %p185 = scmp.eq.s32.totalorder %s29, 0
      %p186 = por %p184, %p185
      %p187 = scmp.ne.s32.totalorder %s173, %s174
      %p188 = scmp.eq.s32.totalorder %s30, 1
      %p189 = por %p187, %p188
      %p191 = scmp.ne.s32.totalorder %s174, %s190
      %p192 = scmp.eq.s32.totalorder %s30, 0
      %p193 = por %p191, %p192
      %p194 = scmp.le.s32.totalorder 1, %s24
      %p195 = scmp.lt.s32.totalorder %s24, 3
      %p196 = pnand %p194, %p195
      %p197 = pneg %p196
      // Predicated region
      $region9: #{tpu_custom_call.1} parent=5 // pred_check
        _
      $region10: #{tpu_custom_call.1} parent=5 // pred_check_branch
        %199 = sbr.rel (%p196) target = $region12
      $region11: #{tpu_custom_call.1} parent=5 // pred_region
        %s200 = ssub.s32 %s24, 1
        // Predicated region
        $region13: #{tpu_custom_call.1} parent=11 // pred_check
          %p201 = pneg %p97
        $region14: #{tpu_custom_call.1} parent=11 // pred_check_branch
          %203 = sbr.rel (%p201) target = $region16
        $region15: #{tpu_custom_call.1} parent=11 // pred_region
          %s205 = ssub.s32 512, 512
          %206 = vsyncadd [#allocation7], %s205
          %s207 = sshll.u32 [#allocation8], 4
          %s208 = int_to_ptr.vmem [resolvable:$true] %s207
          %213 = dma.hbm_to_vmem [thread:$0]  %s2, 512, %s208, [#allocation7], 128, 128, 8
        $region16: #{tpu_custom_call.1} parent=11 // pred_fallthru
          _
        // Predicated region
        $region17: #{tpu_custom_call.1} parent=11 // pred_check
          %p214 = pneg %p118
        $region18: #{tpu_custom_call.1} parent=11 // pred_check_branch
          %216 = sbr.rel (%p214) target = $region20
        $region19: #{tpu_custom_call.1} parent=11 // pred_region
          %s218 = ssub.s32 16, 16
          %219 = vsyncadd [#allocation10], %s218
          %s221 = sshll.u32 [#allocation9], 4
          %s222 = int_to_ptr.vmem [resolvable:$true] %s221
          %224 = dma.hbm_to_vmem [thread:$0]  %s3, 16, %s222, [#allocation10]
        $region20: #{tpu_custom_call.1} parent=11 // pred_fallthru
          _
        // Predicated region
        $region21: #{tpu_custom_call.1} parent=11 // pred_check
          %p225 = pneg %p139
        $region22: #{tpu_custom_call.1} parent=11 // pred_check_branch
          %227 = sbr.rel (%p225) target = $region24
        $region23: #{tpu_custom_call.1} parent=11 // pred_region
          %s229 = ssub.s32 16, 16
          %230 = vsyncadd [#allocation10], %s229
          %s232 = sshll.u32 [#allocation11], 4
          %s233 = int_to_ptr.vmem [resolvable:$true] %s232
          %235 = dma.hbm_to_vmem [thread:$0]  %s4, 16, %s233, [#allocation10]
        $region24: #{tpu_custom_call.1} parent=11 // pred_fallthru
          _
        // Predicated region
        $region25: #{tpu_custom_call.1} parent=11 // pred_check
          %p236 = pneg %p160
        $region26: #{tpu_custom_call.1} parent=11 // pred_check_branch
          %238 = sbr.rel (%p236) target = $region28
        $region27: #{tpu_custom_call.1} parent=11 // pred_region
          _
        $region28: #{tpu_custom_call.1} parent=11 // pred_fallthru
          _
      $region12: #{tpu_custom_call.1} parent=5 // pred_fallthru
        _
      %p239 = scmp.lt.s32.totalorder %s24, 2
      // Predicated region
      $region29: #{tpu_custom_call.1} parent=5 // pred_check
        %p240 = pneg %p239
      $region30: #{tpu_custom_call.1} parent=5 // pred_check_branch
        %242 = sbr.rel (%p240) target = $region32
      $region31: #{tpu_custom_call.1} parent=5 // pred_region
        // Predicated region
        $region33: #{tpu_custom_call.1} parent=31 // pred_check
          %p243 = pneg %p44
        $region34: #{tpu_custom_call.1} parent=31 // pred_check_branch
          %245 = sbr.rel (%p243) target = $region36
        $region35: #{tpu_custom_call.1} parent=31 // pred_region
          %s246 = sand.u32 %s34, 1
          %s247 = scalar_lea.sflag [#allocation4], %s246
          %s248 = sand.u32 %s34, 1
          %s249 = scalar_lea.vmem [#allocation3], %s248
          %s251 = ssub.s32 16, 16
          %252 = vsyncadd %s247, %s251
          %s253 = smul.addr %s24, 16
          %s254 = scalar_lea.hbm %s0, %s253
          %s256 = sshll.u32 %s249, 4
          %s257 = int_to_ptr.vmem [resolvable:$true] %s256
          %259 = dma.hbm_to_vmem [thread:$0]  %s254, 16, %s257, %s247
        $region36: #{tpu_custom_call.1} parent=31 // pred_fallthru
          _
        // Predicated region
        $region37: #{tpu_custom_call.1} parent=31 // pred_check
          %p260 = pneg %p70
        $region38: #{tpu_custom_call.1} parent=31 // pred_check_branch
          %262 = sbr.rel (%p260) target = $region40
        $region39: #{tpu_custom_call.1} parent=31 // pred_region
          %s263 = sand.u32 %s24, 1
          %s264 = scalar_lea.sflag [#allocation7], %s263
          %s265 = sand.u32 %s60, 1
          %s266 = smul.addr %s265, 16
          %s267 = scalar_lea.vmem [#allocation6], %s266
          %s269 = ssub.s32 256, 256
          %270 = vsyncadd %s264, %s269
          %s271 = smul.addr %s24, 2
          %s272 = smul.addr %s271, 128
          %s273 = scalar_lea.hbm %s1, %s272
          %s274 = sshll.u32 %s267, 4
          %s275 = int_to_ptr.vmem [resolvable:$true] %s274
          %280 = dma.hbm_to_vmem [thread:$0]  %s273, 256, %s275, %s264, 128, 128, 8
        $region40: #{tpu_custom_call.1} parent=31 // pred_fallthru
          _
      $region32: #{tpu_custom_call.1} parent=5 // pred_fallthru
        _
      %p281 = scmp.le.s32.totalorder 1, %s24
      %p282 = scmp.lt.s32.totalorder %s24, 3
      %p283 = pnand %p281, %p282
      %p284 = pneg %p283
      // Predicated region
      $region41: #{tpu_custom_call.1} parent=5 // pred_check
        _
      $region42: #{tpu_custom_call.1} parent=5 // pred_check_branch
        %286 = sbr.rel (%p283) target = $region44
      $region43: #{tpu_custom_call.1} parent=5 // pred_region
        %s287 = ssub.s32 %s24, 1
        %s288 = sand.u32 %s37, 1
        %s289 = scalar_lea.sflag [#allocation4], %s288
        %s290 = sand.u32 %s37, 1
        %s291 = scalar_lea.vmem [#allocation3], %s290
        // Predicated region
        $region45: #{tpu_custom_call.1} parent=43 // pred_check
          %p292 = pneg %p50
        $region46: #{tpu_custom_call.1} parent=43 // pred_check_branch
          %294 = sbr.rel (%p292) target = $region48
        $region47: #{tpu_custom_call.1} parent=43 // pred_region
          %295 = dma.done %s289, 16
        $region48: #{tpu_custom_call.1} parent=43 // pred_fallthru
          _
        %s296 = sand.u32 %s29, 1
        %s297 = scalar_lea.sflag [#allocation7], %s296
        %s298 = sand.u32 %s63, 1
        %s299 = smul.addr %s298, 16
        %s300 = scalar_lea.vmem [#allocation6], %s299
        // Predicated region
        $region49: #{tpu_custom_call.1} parent=43 // pred_check
          %p301 = pneg %p76
        $region50: #{tpu_custom_call.1} parent=43 // pred_check_branch
          %303 = sbr.rel (%p301) target = $region52
        $region51: #{tpu_custom_call.1} parent=43 // pred_region
          %304 = dma.done %s297, 256
        $region52: #{tpu_custom_call.1} parent=43 // pred_fallthru
          _
        // Predicated region
        $region53: #{tpu_custom_call.1} parent=43 // pred_check
          %p305 = pneg %p97
        $region54: #{tpu_custom_call.1} parent=43 // pred_check_branch
          %307 = sbr.rel (%p305) target = $region56
        $region55: #{tpu_custom_call.1} parent=43 // pred_region
          %308 = dma.done [#allocation7], 512
        $region56: #{tpu_custom_call.1} parent=43 // pred_fallthru
          _
        // Predicated region
        $region57: #{tpu_custom_call.1} parent=43 // pred_check
          %p309 = pneg %p118
        $region58: #{tpu_custom_call.1} parent=43 // pred_check_branch
          %311 = sbr.rel (%p309) target = $region60
        $region59: #{tpu_custom_call.1} parent=43 // pred_region
          %312 = dma.done [#allocation10], 16
        $region60: #{tpu_custom_call.1} parent=43 // pred_fallthru
          _
        // Predicated region
        $region61: #{tpu_custom_call.1} parent=43 // pred_check
          %p313 = pneg %p139
        $region62: #{tpu_custom_call.1} parent=43 // pred_check_branch
          %315 = sbr.rel (%p313) target = $region64
        $region63: #{tpu_custom_call.1} parent=43 // pred_region
          %316 = dma.done [#allocation10], 16
        $region64: #{tpu_custom_call.1} parent=43 // pred_fallthru
          _
        %s317 = sand.u32 %s37, 1
        %s318 = scalar_lea.sflag [#allocation4], %s317
        %s319 = sand.u32 %s37, 1
        %s320 = scalar_lea.vmem [#allocation3], %s319
        %p321 = pneg %p50
        %p322 = pneg %p47
        %s323 = sand.u32 %s29, 1
        %s324 = scalar_lea.sflag [#allocation7], %s323
        %s325 = sand.u32 %s63, 1
        %s326 = smul.addr %s325, 16
        %s327 = scalar_lea.vmem [#allocation6], %s326
        %p328 = pneg %p76
        %p329 = pneg %p73
        %p330 = pneg %p97
        %p331 = pneg %p94
        %p332 = pneg %p118
        %p333 = pneg %p115
        %p334 = pneg %p139
        %p335 = pneg %p136
        %p336 = pneg %p160
        %p337 = pneg %p157
        %p338 = pneg %p186
        %p339 = pneg %p183
        %s340 = sand.u32 %s173, 1
        %s341 = scalar_lea.sflag [#allocation5], %s340
        %s342 = sand.u32 %s173, 1
        %s343 = scalar_lea.vmem [#allocation12], %s342
        %v344 = vld [vmem:[%s291] sm:$0x1]
        %v345 = vld [vmem:[%s300] sm:$0xff]
        %v346 = vld [vmem:[%s300 + $0x8] sm:$0xff]
        %v347 = vlaneseq
        %v348 = vshrl.u32 %v347, 7
        %v349 = vadd.s32 %v348, 1
        %v350 = vlaneseq
        %v351 = vshrl.u32 %v350, 7
        %v352 = vsub.s32 0, %v351
        %v353 = vrot.slane %v344, %v352
        %vm354 = vcmp.eq.s32.totalorder %v353, %v349
        %v355 = vsel %vm354, 1, 0
        %v356 = vcvt.s32.f32 %v355
        %vm357 = vcmask 130048
        %v358 = vsel %vm357, %v356, 0.0
        %359 = vadd.xlane.f32.xlu0 %v358
        %v360 = vpop.xlane.xlu0 %359
        %v362 = vsel %vm357, %v356, 0
        %364 = vmatprep.subr.mxu0 0.0
        %365 = vmatpush1.msra.mxu0 %v345
        %366 = vmatprep.subr.mxu0 0.0
        %367 = vmatpush1.msra.mxu0 %v346
        %368 = vmatprep.subr.mxu0 0.0
        %369 = vmatpush1.msra.mxu0 0.0
        %370 = vmatprep.subr.mxu0 0.0
        %371 = vmatpush1.msra.mxu0 0.0
        %372 = vmatprep.subr.mxu0 0.0
        %373 = vmatpush1.msra.mxu0 0.0
        %374 = vmatprep.subr.mxu0 0.0
        %375 = vmatpush1.msra.mxu0 0.0
        %376 = vmatprep.subr.mxu0 0.0
        %377 = vmatpush1.msra.mxu0 0.0
        %378 = vmatprep.subr.mxu0 0.0
        %379 = vmatpush1.msra.mxu0 0.0
        %380 = vmatprep.subr.mxu0 0.0
        %381 = vmatpush1.msra.mxu0 0.0
        %382 = vmatprep.subr.mxu0 0.0
        %383 = vmatpush1.msra.mxu0 0.0
        %384 = vmatprep.subr.mxu0 0.0
        %385 = vmatpush1.msra.mxu0 0.0
        %386 = vmatprep.subr.mxu0 0.0
        %387 = vmatpush1.msra.mxu0 0.0
        %388 = vmatprep.subr.mxu0 0.0
        %389 = vmatpush1.msra.mxu0 0.0
        %390 = vmatprep.subr.mxu0 0.0
        %391 = vmatpush1.msra.mxu0 0.0
        %392 = vmatprep.subr.mxu0 0.0
        %393 = vmatpush1.msra.mxu0 0.0
        %394 = vmatprep.subr.mxu0 0.0
        %395 = vmatpush1.msra.mxu0 0.0
        %396 = vmatprep.subr.mxu0 0.0
        %397 = vmatpush1.msra.mxu0 0.0
        %398 = vmatprep.subr.mxu0 0.0
        %399 = vmatpush1.msra.mxu0 0.0
        %400 = vmatprep.subr.mxu0 0.0
        %401 = vmatpush1.msra.mxu0 0.0
        %402 = vmatprep.subr.mxu0 0.0
        %403 = vmatpush1.msra.mxu0 0.0
        %404 = vmatprep.subr.mxu0 0.0
        %405 = vmatpush1.msra.mxu0 0.0
        %406 = vmatprep.subr.mxu0 0.0
        %407 = vmatpush1.msra.mxu0 0.0
        %408 = vmatprep.subr.mxu0 0.0
        %409 = vmatpush1.msra.mxu0 0.0
        %410 = vmatprep.subr.mxu0 0.0
        %411 = vmatpush1.msra.mxu0 0.0
        %412 = vmatprep.subr.mxu0 0.0
        %413 = vmatpush1.msra.mxu0 0.0
        %414 = vmatprep.subr.mxu0 0.0
        %415 = vmatpush1.msra.mxu0 0.0
        %416 = vmatprep.subr.mxu0 0.0
        %417 = vmatpush1.msra.mxu0 0.0
        %418 = vmatprep.subr.mxu0 0.0
        %419 = vmatpush1.msra.mxu0 0.0
        %420 = vmatprep.subr.mxu0 0.0
        %421 = vmatpush1.msra.mxu0 0.0
        %422 = vmatprep.subr.mxu0 0.0
        %423 = vmatpush1.msra.mxu0 0.0
        %424 = vmatprep.subr.mxu0 0.0
        %425 = vmatpush1.msra.mxu0 0.0
        %426 = vmatprep.subr.mxu0 0.0
        %427 = vmatpush1.msra.mxu0 0.0
        %428 = vmatprep.mubr.f32.mxu0 0.0
        %429 = vmatmul.mubr.f32.gmra.mrb[0].mxu0 %v362
        %v430 = vpop.f32.mrb[0].mxu0
        %v431 = vadd.f32 0.0, %v430
        %v432 = vpop.f32.mrb[0].mxu0
        %433 = vdwg.mxu0
        %v434 = vmax.f32 %v360, 1e-12
        %v435 = vrcp.pop %v434
        %v436 = vmul.f32 1.0, %v435
        %v437 = vmul.f32 %v431, %v436
        %v438 = vld [vmem:[#allocation8] sm:$0xff]
        %v439 = vld [vmem:[#allocation8 + $0x8] sm:$0xff]
        %v440 = vld [vmem:[#allocation8 + $0x10] sm:$0xff]
        %v441 = vld [vmem:[#allocation8 + $0x18] sm:$0xff]
        %v442 = vld [vmem:[#allocation9] sm:$0x1]
        %v444 = vlaneseq
        %v445 = vshrl.u32 %v444, 7
        %v446 = vsub.s32 0, %v445
        %v447 = vrot.slane %v442, %v446
        %vm449 = vcmask 261120
        %v451 = vsel %vm449, %v437, 0
        %453 = vmatprep.subr.mxu0 0.0
        %454 = vmatpush1.msra.mxu0 %v438
        %455 = vmatprep.subr.mxu0 0.0
        %456 = vmatpush1.msra.mxu0 %v439
        %457 = vmatprep.subr.mxu0 0.0
        %458 = vmatpush1.msra.mxu0 %v440
        %459 = vmatprep.subr.mxu0 0.0
        %460 = vmatpush1.msra.mxu0 %v441
        %461 = vmatprep.subr.mxu0 0.0
        %462 = vmatpush1.msra.mxu0 0.0
        %463 = vmatprep.subr.mxu0 0.0
        %464 = vmatpush1.msra.mxu0 0.0
        %465 = vmatprep.subr.mxu0 0.0
        %466 = vmatpush1.msra.mxu0 0.0
        %467 = vmatprep.subr.mxu0 0.0
        %468 = vmatpush1.msra.mxu0 0.0
        %469 = vmatprep.subr.mxu0 0.0
        %470 = vmatpush1.msra.mxu0 0.0
        %471 = vmatprep.subr.mxu0 0.0
        %472 = vmatpush1.msra.mxu0 0.0
        %473 = vmatprep.subr.mxu0 0.0
        %474 = vmatpush1.msra.mxu0 0.0
        %475 = vmatprep.subr.mxu0 0.0
        %476 = vmatpush1.msra.mxu0 0.0
        %477 = vmatprep.subr.mxu0 0.0
        %478 = vmatpush1.msra.mxu0 0.0
        %479 = vmatprep.subr.mxu0 0.0
        %480 = vmatpush1.msra.mxu0 0.0
        %481 = vmatprep.subr.mxu0 0.0
        %482 = vmatpush1.msra.mxu0 0.0
        %483 = vmatprep.subr.mxu0 0.0
        %484 = vmatpush1.msra.mxu0 0.0
        %485 = vmatprep.subr.mxu0 0.0
        %486 = vmatpush1.msra.mxu0 0.0
        %487 = vmatprep.subr.mxu0 0.0
        %488 = vmatpush1.msra.mxu0 0.0
        %489 = vmatprep.subr.mxu0 0.0
        %490 = vmatpush1.msra.mxu0 0.0
        %491 = vmatprep.subr.mxu0 0.0
        %492 = vmatpush1.msra.mxu0 0.0
        %493 = vmatprep.subr.mxu0 0.0
        %494 = vmatpush1.msra.mxu0 0.0
        %495 = vmatprep.subr.mxu0 0.0
        %496 = vmatpush1.msra.mxu0 0.0
        %497 = vmatprep.subr.mxu0 0.0
        %498 = vmatpush1.msra.mxu0 0.0
        %499 = vmatprep.subr.mxu0 0.0
        %500 = vmatpush1.msra.mxu0 0.0
        %501 = vmatprep.subr.mxu0 0.0
        %502 = vmatpush1.msra.mxu0 0.0
        %503 = vmatprep.subr.mxu0 0.0
        %504 = vmatpush1.msra.mxu0 0.0
        %505 = vmatprep.subr.mxu0 0.0
        %506 = vmatpush1.msra.mxu0 0.0
        %507 = vmatprep.subr.mxu0 0.0
        %508 = vmatpush1.msra.mxu0 0.0
        %509 = vmatprep.subr.mxu0 0.0
        %510 = vmatpush1.msra.mxu0 0.0
        %511 = vmatprep.subr.mxu0 0.0
        %512 = vmatpush1.msra.mxu0 0.0
        %513 = vmatprep.subr.mxu0 0.0
        %514 = vmatpush1.msra.mxu0 0.0
        %515 = vmatprep.subr.mxu0 0.0
        %516 = vmatpush1.msra.mxu0 0.0
        %517 = vmatprep.mubr.f32.mxu0 0.0
        %518 = vmatmul.mubr.f32.gmra.mrb[0].mxu0 %v451
        %v519 = vpop.f32.mrb[0].mxu0
        %v520 = vadd.f32 %v447, %v519
        %v521 = vpop.f32.mrb[0].mxu0
        %522 = vdwg.mxu0
        %v523 = vtanh.pop %v520
        %v524 = vld [vmem:[#allocation11] sm:$0x1]
        %v525 = vld [vmem:[#allocation2] sm:$0x1]
        %527 = vset.pattern.permute.xlu0 0
        %528 = vperm.xlu0 %527, %v525
        %v529 = vpop.permute.xlu0 %528
        %v531 = vlaneseq
        %v532 = vshrl.u32 %v531, 7
        %v533 = vsub.s32 0, %v532
        %v534 = vrot.slane %v529, %v533
        %v536 = vsel %vm357, %v524, 0
        %v539 = vsel %vm357, %v523, 0
        %541 = vmatprep.subr.mxu0 0.0
        %542 = vmatpush1.xpose.msra.mxu0 %v539
        %543 = vmatprep.subr.mxu0 0.0
        %544 = vmatpush1.xpose.msra.mxu0 0.0
        %545 = vmatprep.subr.mxu0 0.0
        %546 = vmatpush1.xpose.msra.mxu0 0.0
        %547 = vmatprep.subr.mxu0 0.0
        %548 = vmatpush1.xpose.msra.mxu0 0.0
        %549 = vmatprep.subr.mxu0 0.0
        %550 = vmatpush1.xpose.msra.mxu0 0.0
        %551 = vmatprep.subr.mxu0 0.0
        %552 = vmatpush1.xpose.msra.mxu0 0.0
        %553 = vmatprep.subr.mxu0 0.0
        %554 = vmatpush1.xpose.msra.mxu0 0.0
        %555 = vmatprep.subr.mxu0 0.0
        %556 = vmatpush1.xpose.msra.mxu0 0.0
        %557 = vmatprep.subr.mxu0 0.0
        %558 = vmatpush1.xpose.msra.mxu0 0.0
        %559 = vmatprep.subr.mxu0 0.0
        %560 = vmatpush1.xpose.msra.mxu0 0.0
        %561 = vmatprep.subr.mxu0 0.0
        %562 = vmatpush1.xpose.msra.mxu0 0.0
        %563 = vmatprep.subr.mxu0 0.0
        %564 = vmatpush1.xpose.msra.mxu0 0.0
        %565 = vmatprep.subr.mxu0 0.0
        %566 = vmatpush1.xpose.msra.mxu0 0.0
        %567 = vmatprep.subr.mxu0 0.0
        %568 = vmatpush1.xpose.msra.mxu0 0.0
        %569 = vmatprep.subr.mxu0 0.0
        %570 = vmatpush1.xpose.msra.mxu0 0.0
        %571 = vmatprep.subr.mxu0 0.0
        %572 = vmatpush1.xpose.msra.mxu0 0.0
        %573 = vmatprep.subr.mxu0 0.0
        %574 = vmatpush1.xpose.msra.mxu0 0.0
        %575 = vmatprep.subr.mxu0 0.0
        %576 = vmatpush1.xpose.msra.mxu0 0.0
        %577 = vmatprep.subr.mxu0 0.0
        %578 = vmatpush1.xpose.msra.mxu0 0.0
        %579 = vmatprep.subr.mxu0 0.0
        %580 = vmatpush1.xpose.msra.mxu0 0.0
        %581 = vmatprep.subr.mxu0 0.0
        %582 = vmatpush1.xpose.msra.mxu0 0.0
        %583 = vmatprep.subr.mxu0 0.0
        %584 = vmatpush1.xpose.msra.mxu0 0.0
        %585 = vmatprep.subr.mxu0 0.0
        %586 = vmatpush1.xpose.msra.mxu0 0.0
        %587 = vmatprep.subr.mxu0 0.0
        %588 = vmatpush1.xpose.msra.mxu0 0.0
        %589 = vmatprep.subr.mxu0 0.0
        %590 = vmatpush1.xpose.msra.mxu0 0.0
        %591 = vmatprep.subr.mxu0 0.0
        %592 = vmatpush1.xpose.msra.mxu0 0.0
        %593 = vmatprep.subr.mxu0 0.0
        %594 = vmatpush1.xpose.msra.mxu0 0.0
        %595 = vmatprep.subr.mxu0 0.0
        %596 = vmatpush1.xpose.msra.mxu0 0.0
        %597 = vmatprep.subr.mxu0 0.0
        %598 = vmatpush1.xpose.msra.mxu0 0.0
        %599 = vmatprep.subr.mxu0 0.0
        %600 = vmatpush1.xpose.msra.mxu0 0.0
        %601 = vmatprep.subr.mxu0 0.0
        %602 = vmatpush1.xpose.msra.mxu0 0.0
        %603 = vmatprep.subr.mxu0 0.0
        %604 = vmatpush1.xpose.msra.mxu0 0.0
        %605 = vmatprep.mubr.f32.mxu0 0.0
        %606 = vmatmul.mubr.f32.gmra.mrb[0].mxu0 %v536
        %v607 = vpop.f32.mrb[0].mxu0
        %v608 = vadd.f32 %v534, %v607
        %v609 = vpop.f32.mrb[0].mxu0
        %610 = vdwg.mxu0
        %vm611 = vcmask 122880
        %v612 = vsel %vm611, %v344, 2147483648
        %v613 = vand.u32 %v612, 65535
        %v614 = vshra.s32 %v612, 16
        %v615 = vcvt.s32.f32 %v613
        %v616 = vcvt.s32.f32 %v614
        %617 = vmax.xlane.f32.xlu0 %v616
        %v618 = vpop.xlane.xlu0 %617
        %vm619 = vcmp.eq.f32.partialorder %v616, %v618
        %v620 = vsel %vm619, %v615, -inf
        %621 = vmax.xlane.f32.xlu0 %v620
        %v622 = vpop.xlane.xlu0 %621
        %v623 = vcvt.f32.s32 %v622
        %v624 = vcvt.f32.s32 %v618
        %v625 = vshll.u32 %v624, 16
        %v626 = vadd.s32 %v625, %v623
        %v627 = vlaneseq
        %v628 = vand.u32 %v627, 127
        %v629 = vmul.u32 %v348, 8
        %vm630 = vcmp.ge.s32.totalorder %v628, %v629
        %v631 = vadd.s32 %v629, %v626
        %vm632 = vcmp.lt.s32.totalorder %v628, %v631
        %vm633 = vmand %vm630, %vm632
        %v634 = vsel %vm633, %v608, -10000.0
        %vm635 = vcmask 57344
        %v636 = vsel %vm635, %v634, -inf
        %637 = vmax.xlane.f32.xlu0 %v636
        %v638 = vpop.xlane.xlu0 %637
        %v639 = vsub.f32 %v634, %v638
        %v640 = vmul.f32 %v639, 1.442695
        %v641 = vpow.pop %v640
        %v642 = vsel %vm633, %v641, 0.0
        %v643 = vsel %vm635, %v642, 0.0
        %644 = vadd.xlane.f32.xlu0 %v643
        %v645 = vpop.xlane.xlu0 %644
        %v646 = vmax.f32 %v645, 1e-30
        %v647 = vrcp.pop %v646
        %v648 = vmul.f32 %v642, %v647
        %vm649 = vcmask 64512
        %v651 = vsel %vm649, %v648, 0
        %653 = vmatprep.subr.mxu0 0.0
        %v654 = vand.u32 %v437, 4294901760
        %655 = vmatpush1.msra.mxu0 %v654
        %656 = vmatprep.subr.mxu0 0.0
        %657 = vmatpush1.msra.mxu0 0.0
        %658 = vmatprep.subr.mxu0 0.0
        %659 = vmatpush1.msra.mxu0 0.0
        %660 = vmatprep.subr.mxu0 0.0
        %661 = vmatpush1.msra.mxu0 0.0
        %662 = vmatprep.subr.mxu0 0.0
        %663 = vmatpush1.msra.mxu0 0.0
        %664 = vmatprep.subr.mxu0 0.0
        %665 = vmatpush1.msra.mxu0 0.0
        %666 = vmatprep.subr.mxu0 0.0
        %667 = vmatpush1.msra.mxu0 0.0
        %668 = vmatprep.subr.mxu0 0.0
        %669 = vmatpush1.msra.mxu0 0.0
        %670 = vmatprep.subr.mxu0 0.0
        %671 = vmatpush1.msra.mxu0 0.0
        %672 = vmatprep.subr.mxu0 0.0
        %673 = vmatpush1.msra.mxu0 0.0
        %674 = vmatprep.subr.mxu0 0.0
        %675 = vmatpush1.msra.mxu0 0.0
        %676 = vmatprep.subr.mxu0 0.0
        %677 = vmatpush1.msra.mxu0 0.0
        %678 = vmatprep.subr.mxu0 0.0
        %679 = vmatpush1.msra.mxu0 0.0
        %680 = vmatprep.subr.mxu0 0.0
        %681 = vmatpush1.msra.mxu0 0.0
        %682 = vmatprep.subr.mxu0 0.0
        %683 = vmatpush1.msra.mxu0 0.0
        %684 = vmatprep.subr.mxu0 0.0
        %685 = vmatpush1.msra.mxu0 0.0
        %686 = vmatprep.subr.mxu0 0.0
        %687 = vmatpush1.msra.mxu0 0.0
        %688 = vmatprep.subr.mxu0 0.0
        %689 = vmatpush1.msra.mxu0 0.0
        %690 = vmatprep.subr.mxu0 0.0
        %691 = vmatpush1.msra.mxu0 0.0
        %692 = vmatprep.subr.mxu0 0.0
        %693 = vmatpush1.msra.mxu0 0.0
        %694 = vmatprep.subr.mxu0 0.0
        %695 = vmatpush1.msra.mxu0 0.0
        %696 = vmatprep.subr.mxu0 0.0
        %697 = vmatpush1.msra.mxu0 0.0
        %698 = vmatprep.subr.mxu0 0.0
        %699 = vmatpush1.msra.mxu0 0.0
        %700 = vmatprep.subr.mxu0 0.0
        %701 = vmatpush1.msra.mxu0 0.0
        %702 = vmatprep.subr.mxu0 0.0
        %703 = vmatpush1.msra.mxu0 0.0
        %704 = vmatprep.subr.mxu0 0.0
        %705 = vmatpush1.msra.mxu0 0.0
        %706 = vmatprep.subr.mxu0 0.0
        %707 = vmatpush1.msra.mxu0 0.0
        %708 = vmatprep.subr.mxu0 0.0
        %709 = vmatpush1.msra.mxu0 0.0
        %710 = vmatprep.subr.mxu0 0.0
        %711 = vmatpush1.msra.mxu0 0.0
        %712 = vmatprep.subr.mxu0 0.0
        %713 = vmatpush1.msra.mxu0 0.0
        %714 = vmatprep.subr.mxu0 0.0
        %715 = vmatpush1.msra.mxu0 0.0
        %716 = vmatprep.subr.mxu0 0.0
        %717 = vmatpush1.msra.mxu0 0.0
        %718 = vmatprep.mubr.f32.mxu0 0.0
        %v719 = vand.u32 %v651, 4294901760
        %v720 = vsub.f32 %v651, %v719
        %v721 = vand.u32 %v720, 4294901760
        %v722 = vsub.f32 %v720, %v721
        %v723 = vand.u32 %v722, 4294901760
        %724 = vmatmul.mubr.f32.gmra.mrb[0].mxu0 %v723
        %v725 = vpop.f32.mrb[0].mxu0
        %v726 = vadd.f32 0.0, %v725
        %v727 = vpop.f32.mrb[0].mxu0
        %728 = vdwg.mxu0
        %729 = vmatprep.subr.mxu0 0.0
        %v730 = vand.u32 %v437, 4294901760
        %v731 = vsub.f32 %v437, %v730
        %v732 = vand.u32 %v731, 4294901760
        %v733 = vsub.f32 %v731, %v732
        %v734 = vand.u32 %v733, 4294901760
        %735 = vmatpush1.msra.mxu0 %v734
        %736 = vmatprep.subr.mxu0 0.0
        %737 = vmatpush1.msra.mxu0 0.0
        %738 = vmatprep.subr.mxu0 0.0
        %739 = vmatpush1.msra.mxu0 0.0
        %740 = vmatprep.subr.mxu0 0.0
        %741 = vmatpush1.msra.mxu0 0.0
        %742 = vmatprep.subr.mxu0 0.0
        %743 = vmatpush1.msra.mxu0 0.0
        %744 = vmatprep.subr.mxu0 0.0
        %745 = vmatpush1.msra.mxu0 0.0
        %746 = vmatprep.subr.mxu0 0.0
        %747 = vmatpush1.msra.mxu0 0.0
        %748 = vmatprep.subr.mxu0 0.0
        %749 = vmatpush1.msra.mxu0 0.0
        %750 = vmatprep.subr.mxu0 0.0
        %751 = vmatpush1.msra.mxu0 0.0
        %752 = vmatprep.subr.mxu0 0.0
        %753 = vmatpush1.msra.mxu0 0.0
        %754 = vmatprep.subr.mxu0 0.0
        %755 = vmatpush1.msra.mxu0 0.0
        %756 = vmatprep.subr.mxu0 0.0
        %757 = vmatpush1.msra.mxu0 0.0
        %758 = vmatprep.subr.mxu0 0.0
        %759 = vmatpush1.msra.mxu0 0.0
        %760 = vmatprep.subr.mxu0 0.0
        %761 = vmatpush1.msra.mxu0 0.0
        %762 = vmatprep.subr.mxu0 0.0
        %763 = vmatpush1.msra.mxu0 0.0
        %764 = vmatprep.subr.mxu0 0.0
        %765 = vmatpush1.msra.mxu0 0.0
        %766 = vmatprep.subr.mxu0 0.0
        %767 = vmatpush1.msra.mxu0 0.0
        %768 = vmatprep.subr.mxu0 0.0
        %769 = vmatpush1.msra.mxu0 0.0
        %770 = vmatprep.subr.mxu0 0.0
        %771 = vmatpush1.msra.mxu0 0.0
        %772 = vmatprep.subr.mxu0 0.0
        %773 = vmatpush1.msra.mxu0 0.0
        %774 = vmatprep.subr.mxu0 0.0
        %775 = vmatpush1.msra.mxu0 0.0
        %776 = vmatprep.subr.mxu0 0.0
        %777 = vmatpush1.msra.mxu0 0.0
        %778 = vmatprep.subr.mxu0 0.0
        %779 = vmatpush1.msra.mxu0 0.0
        %780 = vmatprep.subr.mxu0 0.0
        %781 = vmatpush1.msra.mxu0 0.0
        %782 = vmatprep.subr.mxu0 0.0
        %783 = vmatpush1.msra.mxu0 0.0
        %784 = vmatprep.subr.mxu0 0.0
        %785 = vmatpush1.msra.mxu0 0.0
        %786 = vmatprep.subr.mxu0 0.0
        %787 = vmatpush1.msra.mxu0 0.0
        %788 = vmatprep.subr.mxu0 0.0
        %789 = vmatpush1.msra.mxu0 0.0
        %790 = vmatprep.subr.mxu0 0.0
        %791 = vmatpush1.msra.mxu0 0.0
        %792 = vmatprep.subr.mxu0 0.0
        %793 = vmatpush1.msra.mxu0 0.0
        %794 = vmatprep.subr.mxu0 0.0
        %795 = vmatpush1.msra.mxu0 0.0
        %796 = vmatprep.subr.mxu0 0.0
        %797 = vmatpush1.msra.mxu0 0.0
        %798 = vmatprep.mubr.f32.mxu0 0.0
        %v799 = vand.u32 %v651, 4294901760
        %800 = vmatmul.mubr.f32.gmra.mrb[0].mxu0 %v799
        %v801 = vpop.f32.mrb[0].mxu0
        %v802 = vadd.f32 %v726, %v801
        %v803 = vpop.f32.mrb[0].mxu0
        %804 = vdwg.mxu0
        %805 = vmatprep.subr.mxu0 0.0
        %v806 = vand.u32 %v437, 4294901760
        %v807 = vsub.f32 %v437, %v806
        %808 = vmatpush1.msra.mxu0 %v807
        %809 = vmatprep.subr.mxu0 0.0
        %810 = vmatpush1.msra.mxu0 0.0
        %811 = vmatprep.subr.mxu0 0.0
        %812 = vmatpush1.msra.mxu0 0.0
        %813 = vmatprep.subr.mxu0 0.0
        %814 = vmatpush1.msra.mxu0 0.0
        %815 = vmatprep.subr.mxu0 0.0
        %816 = vmatpush1.msra.mxu0 0.0
        %817 = vmatprep.subr.mxu0 0.0
        %818 = vmatpush1.msra.mxu0 0.0
        %819 = vmatprep.subr.mxu0 0.0
        %820 = vmatpush1.msra.mxu0 0.0
        %821 = vmatprep.subr.mxu0 0.0
        %822 = vmatpush1.msra.mxu0 0.0
        %823 = vmatprep.subr.mxu0 0.0
        %824 = vmatpush1.msra.mxu0 0.0
        %825 = vmatprep.subr.mxu0 0.0
        %826 = vmatpush1.msra.mxu0 0.0
        %827 = vmatprep.subr.mxu0 0.0
        %828 = vmatpush1.msra.mxu0 0.0
        %829 = vmatprep.subr.mxu0 0.0
        %830 = vmatpush1.msra.mxu0 0.0
        %831 = vmatprep.subr.mxu0 0.0
        %832 = vmatpush1.msra.mxu0 0.0
        %833 = vmatprep.subr.mxu0 0.0
        %834 = vmatpush1.msra.mxu0 0.0
        %835 = vmatprep.subr.mxu0 0.0
        %836 = vmatpush1.msra.mxu0 0.0
        %837 = vmatprep.subr.mxu0 0.0
        %838 = vmatpush1.msra.mxu0 0.0
        %839 = vmatprep.subr.mxu0 0.0
        %840 = vmatpush1.msra.mxu0 0.0
        %841 = vmatprep.subr.mxu0 0.0
        %842 = vmatpush1.msra.mxu0 0.0
        %843 = vmatprep.subr.mxu0 0.0
        %844 = vmatpush1.msra.mxu0 0.0
        %845 = vmatprep.subr.mxu0 0.0
        %846 = vmatpush1.msra.mxu0 0.0
        %847 = vmatprep.subr.mxu0 0.0
        %848 = vmatpush1.msra.mxu0 0.0
        %849 = vmatprep.subr.mxu0 0.0
        %850 = vmatpush1.msra.mxu0 0.0
        %851 = vmatprep.subr.mxu0 0.0
        %852 = vmatpush1.msra.mxu0 0.0
        %853 = vmatprep.subr.mxu0 0.0
        %854 = vmatpush1.msra.mxu0 0.0
        %855 = vmatprep.subr.mxu0 0.0
        %856 = vmatpush1.msra.mxu0 0.0
        %857 = vmatprep.subr.mxu0 0.0
        %858 = vmatpush1.msra.mxu0 0.0
        %859 = vmatprep.subr.mxu0 0.0
        %860 = vmatpush1.msra.mxu0 0.0
        %861 = vmatprep.subr.mxu0 0.0
        %862 = vmatpush1.msra.mxu0 0.0
        %863 = vmatprep.subr.mxu0 0.0
        %864 = vmatpush1.msra.mxu0 0.0
        %865 = vmatprep.subr.mxu0 0.0
        %866 = vmatpush1.msra.mxu0 0.0
        %867 = vmatprep.subr.mxu0 0.0
        %868 = vmatpush1.msra.mxu0 0.0
        %869 = vmatprep.subr.mxu0 0.0
        %870 = vmatpush1.msra.mxu0 0.0
        %871 = vmatprep.mubr.f32.mxu0 0.0
        %v872 = vand.u32 %v651, 4294901760
        %v873 = vsub.f32 %v651, %v872
        %874 = vmatmul.mubr.f32.gmra.mrb[0].mxu0 %v873
        %v875 = vpop.f32.mrb[0].mxu0
        %v876 = vadd.f32 %v802, %v875
        %v877 = vpop.f32.mrb[0].mxu0
        %878 = vdwg.mxu0
        %879 = vmatprep.subr.mxu0 0.0
        %v880 = vand.u32 %v437, 4294901760
        %881 = vmatpush1.msra.mxu0 %v880
        %882 = vmatprep.subr.mxu0 0.0
        %883 = vmatpush1.msra.mxu0 0.0
        %884 = vmatprep.subr.mxu0 0.0
        %885 = vmatpush1.msra.mxu0 0.0
        %886 = vmatprep.subr.mxu0 0.0
        %887 = vmatpush1.msra.mxu0 0.0
        %888 = vmatprep.subr.mxu0 0.0
        %889 = vmatpush1.msra.mxu0 0.0
        %890 = vmatprep.subr.mxu0 0.0
        %891 = vmatpush1.msra.mxu0 0.0
        %892 = vmatprep.subr.mxu0 0.0
        %893 = vmatpush1.msra.mxu0 0.0
        %894 = vmatprep.subr.mxu0 0.0
        %895 = vmatpush1.msra.mxu0 0.0
        %896 = vmatprep.subr.mxu0 0.0
        %897 = vmatpush1.msra.mxu0 0.0
        %898 = vmatprep.subr.mxu0 0.0
        %899 = vmatpush1.msra.mxu0 0.0
        %900 = vmatprep.subr.mxu0 0.0
        %901 = vmatpush1.msra.mxu0 0.0
        %902 = vmatprep.subr.mxu0 0.0
        %903 = vmatpush1.msra.mxu0 0.0
        %904 = vmatprep.subr.mxu0 0.0
        %905 = vmatpush1.msra.mxu0 0.0
        %906 = vmatprep.subr.mxu0 0.0
        %907 = vmatpush1.msra.mxu0 0.0
        %908 = vmatprep.subr.mxu0 0.0
        %909 = vmatpush1.msra.mxu0 0.0
        %910 = vmatprep.subr.mxu0 0.0
        %911 = vmatpush1.msra.mxu0 0.0
        %912 = vmatprep.subr.mxu0 0.0
        %913 = vmatpush1.msra.mxu0 0.0
        %914 = vmatprep.subr.mxu0 0.0
        %915 = vmatpush1.msra.mxu0 0.0
        %916 = vmatprep.subr.mxu0 0.0
        %917 = vmatpush1.msra.mxu0 0.0
        %918 = vmatprep.subr.mxu0 0.0
        %919 = vmatpush1.msra.mxu0 0.0
        %920 = vmatprep.subr.mxu0 0.0
        %921 = vmatpush1.msra.mxu0 0.0
        %922 = vmatprep.subr.mxu0 0.0
        %923 = vmatpush1.msra.mxu0 0.0
        %924 = vmatprep.subr.mxu0 0.0
        %925 = vmatpush1.msra.mxu0 0.0
        %926 = vmatprep.subr.mxu0 0.0
        %927 = vmatpush1.msra.mxu0 0.0
        %928 = vmatprep.subr.mxu0 0.0
        %929 = vmatpush1.msra.mxu0 0.0
        %930 = vmatprep.subr.mxu0 0.0
        %931 = vmatpush1.msra.mxu0 0.0
        %932 = vmatprep.subr.mxu0 0.0
        %933 = vmatpush1.msra.mxu0 0.0
        %934 = vmatprep.subr.mxu0 0.0
        %935 = vmatpush1.msra.mxu0 0.0
        %936 = vmatprep.subr.mxu0 0.0
        %937 = vmatpush1.msra.mxu0 0.0
        %938 = vmatprep.subr.mxu0 0.0
        %939 = vmatpush1.msra.mxu0 0.0
        %940 = vmatprep.subr.mxu0 0.0
        %941 = vmatpush1.msra.mxu0 0.0
        %942 = vmatprep.subr.mxu0 0.0
        %943 = vmatpush1.msra.mxu0 0.0
        %944 = vmatprep.mubr.f32.mxu0 0.0
        %v945 = vand.u32 %v651, 4294901760
        %v946 = vsub.f32 %v651, %v945
        %v947 = vand.u32 %v946, 4294901760
        %948 = vmatmul.mubr.f32.gmra.mrb[0].mxu0 %v947
        %v949 = vpop.f32.mrb[0].mxu0
        %v950 = vadd.f32 %v876, %v949
        %v951 = vpop.f32.mrb[0].mxu0
        %952 = vdwg.mxu0
        %953 = vmatprep.subr.mxu0 0.0
        %v954 = vand.u32 %v437, 4294901760
        %v955 = vsub.f32 %v437, %v954
        %v956 = vand.u32 %v955, 4294901760
        %957 = vmatpush1.msra.mxu0 %v956
        %958 = vmatprep.subr.mxu0 0.0
        %959 = vmatpush1.msra.mxu0 0.0
        %960 = vmatprep.subr.mxu0 0.0
        %961 = vmatpush1.msra.mxu0 0.0
        %962 = vmatprep.subr.mxu0 0.0
        %963 = vmatpush1.msra.mxu0 0.0
        %964 = vmatprep.subr.mxu0 0.0
        %965 = vmatpush1.msra.mxu0 0.0
        %966 = vmatprep.subr.mxu0 0.0
        %967 = vmatpush1.msra.mxu0 0.0
        %968 = vmatprep.subr.mxu0 0.0
        %969 = vmatpush1.msra.mxu0 0.0
        %970 = vmatprep.subr.mxu0 0.0
        %971 = vmatpush1.msra.mxu0 0.0
        %972 = vmatprep.subr.mxu0 0.0
        %973 = vmatpush1.msra.mxu0 0.0
        %974 = vmatprep.subr.mxu0 0.0
        %975 = vmatpush1.msra.mxu0 0.0
        %976 = vmatprep.subr.mxu0 0.0
        %977 = vmatpush1.msra.mxu0 0.0
        %978 = vmatprep.subr.mxu0 0.0
        %979 = vmatpush1.msra.mxu0 0.0
        %980 = vmatprep.subr.mxu0 0.0
        %981 = vmatpush1.msra.mxu0 0.0
        %982 = vmatprep.subr.mxu0 0.0
        %983 = vmatpush1.msra.mxu0 0.0
        %984 = vmatprep.subr.mxu0 0.0
        %985 = vmatpush1.msra.mxu0 0.0
        %986 = vmatprep.subr.mxu0 0.0
        %987 = vmatpush1.msra.mxu0 0.0
        %988 = vmatprep.subr.mxu0 0.0
        %989 = vmatpush1.msra.mxu0 0.0
        %990 = vmatprep.subr.mxu0 0.0
        %991 = vmatpush1.msra.mxu0 0.0
        %992 = vmatprep.subr.mxu0 0.0
        %993 = vmatpush1.msra.mxu0 0.0
        %994 = vmatprep.subr.mxu0 0.0
        %995 = vmatpush1.msra.mxu0 0.0
        %996 = vmatprep.subr.mxu0 0.0
        %997 = vmatpush1.msra.mxu0 0.0
        %998 = vmatprep.subr.mxu0 0.0
        %999 = vmatpush1.msra.mxu0 0.0
        %1000 = vmatprep.subr.mxu0 0.0
        %1001 = vmatpush1.msra.mxu0 0.0
        %1002 = vmatprep.subr.mxu0 0.0
        %1003 = vmatpush1.msra.mxu0 0.0
        %1004 = vmatprep.subr.mxu0 0.0
        %1005 = vmatpush1.msra.mxu0 0.0
        %1006 = vmatprep.subr.mxu0 0.0
        %1007 = vmatpush1.msra.mxu0 0.0
        %1008 = vmatprep.subr.mxu0 0.0
        %1009 = vmatpush1.msra.mxu0 0.0
        %1010 = vmatprep.subr.mxu0 0.0
        %1011 = vmatpush1.msra.mxu0 0.0
        %1012 = vmatprep.subr.mxu0 0.0
        %1013 = vmatpush1.msra.mxu0 0.0
        %1014 = vmatprep.subr.mxu0 0.0
        %1015 = vmatpush1.msra.mxu0 0.0
        %1016 = vmatprep.subr.mxu0 0.0
        %1017 = vmatpush1.msra.mxu0 0.0
        %1018 = vmatprep.subr.mxu0 0.0
        %1019 = vmatpush1.msra.mxu0 0.0
        %1020 = vmatprep.mubr.f32.mxu0 0.0
        %v1021 = vand.u32 %v651, 4294901760
        %1022 = vmatmul.mubr.f32.gmra.mrb[0].mxu0 %v1021
        %v1023 = vpop.f32.mrb[0].mxu0
        %v1024 = vadd.f32 %v950, %v1023
        %v1025 = vpop.f32.mrb[0].mxu0
        %1026 = vdwg.mxu0
        %1027 = vmatprep.subr.mxu0 0.0
        %v1028 = vand.u32 %v437, 4294901760
        %1029 = vmatpush1.msra.mxu0 %v1028
        %1030 = vmatprep.subr.mxu0 0.0
        %1031 = vmatpush1.msra.mxu0 0.0
        %1032 = vmatprep.subr.mxu0 0.0
        %1033 = vmatpush1.msra.mxu0 0.0
        %1034 = vmatprep.subr.mxu0 0.0
        %1035 = vmatpush1.msra.mxu0 0.0
        %1036 = vmatprep.subr.mxu0 0.0
        %1037 = vmatpush1.msra.mxu0 0.0
        %1038 = vmatprep.subr.mxu0 0.0
        %1039 = vmatpush1.msra.mxu0 0.0
        %1040 = vmatprep.subr.mxu0 0.0
        %1041 = vmatpush1.msra.mxu0 0.0
        %1042 = vmatprep.subr.mxu0 0.0
        %1043 = vmatpush1.msra.mxu0 0.0
        %1044 = vmatprep.subr.mxu0 0.0
        %1045 = vmatpush1.msra.mxu0 0.0
        %1046 = vmatprep.subr.mxu0 0.0
        %1047 = vmatpush1.msra.mxu0 0.0
        %1048 = vmatprep.subr.mxu0 0.0
        %1049 = vmatpush1.msra.mxu0 0.0
        %1050 = vmatprep.subr.mxu0 0.0
        %1051 = vmatpush1.msra.mxu0 0.0
        %1052 = vmatprep.subr.mxu0 0.0
        %1053 = vmatpush1.msra.mxu0 0.0
        %1054 = vmatprep.subr.mxu0 0.0
        %1055 = vmatpush1.msra.mxu0 0.0
        %1056 = vmatprep.subr.mxu0 0.0
        %1057 = vmatpush1.msra.mxu0 0.0
        %1058 = vmatprep.subr.mxu0 0.0
        %1059 = vmatpush1.msra.mxu0 0.0
        %1060 = vmatprep.subr.mxu0 0.0
        %1061 = vmatpush1.msra.mxu0 0.0
        %1062 = vmatprep.subr.mxu0 0.0
        %1063 = vmatpush1.msra.mxu0 0.0
        %1064 = vmatprep.subr.mxu0 0.0
        %1065 = vmatpush1.msra.mxu0 0.0
        %1066 = vmatprep.subr.mxu0 0.0
        %1067 = vmatpush1.msra.mxu0 0.0
        %1068 = vmatprep.subr.mxu0 0.0
        %1069 = vmatpush1.msra.mxu0 0.0
        %1070 = vmatprep.subr.mxu0 0.0
        %1071 = vmatpush1.msra.mxu0 0.0
        %1072 = vmatprep.subr.mxu0 0.0
        %1073 = vmatpush1.msra.mxu0 0.0
        %1074 = vmatprep.subr.mxu0 0.0
        %1075 = vmatpush1.msra.mxu0 0.0
        %1076 = vmatprep.subr.mxu0 0.0
        %1077 = vmatpush1.msra.mxu0 0.0
        %1078 = vmatprep.subr.mxu0 0.0
        %1079 = vmatpush1.msra.mxu0 0.0
        %1080 = vmatprep.subr.mxu0 0.0
        %1081 = vmatpush1.msra.mxu0 0.0
        %1082 = vmatprep.subr.mxu0 0.0
        %1083 = vmatpush1.msra.mxu0 0.0
        %1084 = vmatprep.subr.mxu0 0.0
        %1085 = vmatpush1.msra.mxu0 0.0
        %1086 = vmatprep.subr.mxu0 0.0
        %1087 = vmatpush1.msra.mxu0 0.0
        %1088 = vmatprep.subr.mxu0 0.0
        %1089 = vmatpush1.msra.mxu0 0.0
        %1090 = vmatprep.subr.mxu0 0.0
        %1091 = vmatpush1.msra.mxu0 0.0
        %1092 = vmatprep.mubr.f32.mxu0 0.0
        %v1093 = vand.u32 %v651, 4294901760
        %1094 = vmatmul.mubr.f32.gmra.mrb[0].mxu0 %v1093
        %v1095 = vpop.f32.mrb[0].mxu0
        %v1096 = vadd.f32 %v1024, %v1095
        %v1097 = vpop.f32.mrb[0].mxu0
        %1098 = vdwg.mxu0
        %vm1099 = vcmask 253952
        %1100 = vst.msk [vmem:[%s343] sm:$0x1] %vm1099, %v1096
        %s1101 = sand.u32 %s173, 1
        %s1102 = scalar_lea.sflag [#allocation5], %s1101
        %s1103 = sand.u32 %s173, 1
        %s1104 = scalar_lea.vmem [#allocation12], %s1103
        // Predicated region
        $region65: #{tpu_custom_call.1} parent=43 // pred_check
          %p1105 = pneg %p183
        $region66: #{tpu_custom_call.1} parent=43 // pred_check_branch
          %1107 = sbr.rel (%p1105) target = $region68
        $region67: #{tpu_custom_call.1} parent=43 // pred_region
          %s1109 = ssub.s32 16, 16
          %1110 = vsyncadd %s1102, %s1109
          %s1111 = smul.addr %s29, 16
          %s1112 = scalar_lea.hbm %s6, %s1111
          %s1114 = sshll.u32 %s1104, 4
          %s1115 = int_to_ptr.vmem [resolvable:$true] %s1114
          %1117 = dma.vmem_to_hbm [thread:$0]  %s1115, 16, %s1112, %s1102
        $region68: #{tpu_custom_call.1} parent=43 // pred_fallthru
          _
      $region44: #{tpu_custom_call.1} parent=5 // pred_fallthru
        _
      %p1118 = scmp.le.s32.totalorder 2, %s24
      // Predicated region
      $region69: #{tpu_custom_call.1} parent=5 // pred_check
        %p1119 = pneg %p1118
      $region70: #{tpu_custom_call.1} parent=5 // pred_check_branch
        %1121 = sbr.rel (%p1119) target = $region72
      $region71: #{tpu_custom_call.1} parent=5 // pred_region
        %s1122 = ssub.s32 %s24, 2
        // Predicated region
        $region73: #{tpu_custom_call.1} parent=71 // pred_check
          %p1123 = pneg %p189
        $region74: #{tpu_custom_call.1} parent=71 // pred_check_branch
          %1125 = sbr.rel (%p1123) target = $region76
        $region75: #{tpu_custom_call.1} parent=71 // pred_region
          %s1126 = sand.u32 %s174, 1
          %s1127 = scalar_lea.sflag [#allocation5], %s1126
          %s1128 = sand.u32 %s174, 1
          %s1129 = scalar_lea.vmem [#allocation12], %s1128
          %1130 = dma.done %s1127, 16
        $region76: #{tpu_custom_call.1} parent=71 // pred_fallthru
          _
      $region72: #{tpu_custom_call.1} parent=5 // pred_fallthru
        _
    $region6: #{tpu_custom_call.1} parent=1 // loop_footer
      %s28 = sadd.s32 1, %s24
    $region7: #{tpu_custom_call.1} parent=1 // loop_footer_branch
      %23 = sbr.rel target = $region3
    $region8: #{tpu_custom_call.1} parent=1 // loop_exit
      _
    %1131 = vsyncpa [#allocation4], 1
    %s1132 = scalar_lea.sflag [#allocation4], 1
    %1133 = vsyncpa %s1132, 1
    %1134 = vsyncpa [#allocation7], 1
    %s1135 = scalar_lea.sflag [#allocation7], 1
    %1136 = vsyncpa %s1135, 1
    %1137 = vsyncpa [#allocation10], 1
    %1138 = vsyncpa [#allocation5], 1
    %s1139 = scalar_lea.sflag [#allocation5], 1
    %1140 = vsyncpa %s1139, 1

</llo_original>
